<compile_context>
chip_gen: v5e
topology: v5e:2x2
jax: 0.10.0
libtpu: 0.0.40
codegen_flags: <defaults>
</compile_context>

<pallas_src>
import math
import functools

import jax
import jax.numpy as jnp
from jax import lax
from jax.experimental import pallas as pl
from jax.experimental.pallas import tpu as pltpu


_SQRT1_2 = 0.7071067811865476
_GELU_TANH_C = 0.7978845608028654  # sqrt(2/pi)


def _round_up(x, m):
    return ((x + m - 1) // m) * m


def _vmem_capacity_bytes():
    try:
        return int(pltpu.get_tpu_info().vmem_capacity_bytes)
    except Exception:
        return 64 << 20  # conservative default (v7x per-TensorCore)


def _gelu(h, approximate):
    if approximate:
        # tanh approximation -> transcendental runs on the EUP slot (v6e/v7x).
        return 0.5 * h * (1.0 + jnp.tanh(_GELU_TANH_C * (h + 0.044715 * h * h * h)))
    # Exact erf GELU (matches torch.nn.functional.gelu, approximate='none').
    return 0.5 * h * (1.0 + lax.erf(h * _SQRT1_2))


def _mlp_kernel_resident(x_ref, w1_ref, w2_ref, o_ref, *, approximate_gelu):
    # Weights are VMEM-resident (constant index_map); no reduction axis, no
    # accumulator scratch, no init/finalize RMW.
    h = jnp.dot(x_ref[...], w1_ref[...], preferred_element_type=jnp.float32)
    h = _gelu(h, approximate_gelu)
    o_ref[...] = jnp.dot(h.astype(w2_ref.dtype), w2_ref[...],
                         preferred_element_type=jnp.float32).astype(o_ref.dtype)


def _mlp_kernel_strips(x_ref, w1_ref, w2_ref, o_ref, acc_ref, *, approximate_gelu):
    # Grid = (M tiles, H strips).  Axis 1 is the reduction over the hidden dim.
    k = pl.program_id(1)

    @pl.when(k == 0)
    def _():
        acc_ref[...] = jnp.zeros_like(acc_ref)

    h = jnp.dot(x_ref[...], w1_ref[...], preferred_element_type=jnp.float32)
    h = _gelu(h, approximate_gelu)
    acc_ref[...] += jnp.dot(h.astype(w2_ref.dtype), w2_ref[...],
                            preferred_element_type=jnp.float32)

    @pl.when(k == pl.num_programs(1) - 1)
    def _():
        o_ref[...] = acc_ref[...].astype(o_ref.dtype)


def prepare_mlp_weights(w_fc, w_proj, *, compute_dtype=jnp.bfloat16):
    """Hoisted glue (call once at load time): transpose, cast, pad weights.

    w_fc: (4*n_embd, n_embd); w_proj: (n_embd, 4*n_embd).
    Returns (w1p, w2p) with shapes (Dp, Hp) and (Hp, Dp), lane-dense (x128).
    Zero-padding is inert: gelu(0) == 0 and padded rows/cols contribute nothing.
    """
    H, D = w_fc.shape
    assert w_proj.shape == (D, H)
    Dp = _round_up(D, 128)
    Hp = _round_up(H, 128)
    w1 = w_fc.T.astype(compute_dtype)    # (D, H)
    w2 = w_proj.T.astype(compute_dtype)  # (H, D)
    if (Dp, Hp) != (D, H):
        w1 = jnp.pad(w1, ((0, Dp - D), (0, Hp - H)))
        w2 = jnp.pad(w2, ((0, Hp - H), (0, Dp - D)))
    return w1, w2


def mlp_forward(x, w1p, w2p, *, tm=None, th=None, approximate_gelu=False,
                out_dtype=None):
    """x: (..., n_embd); (w1p, w2p) from prepare_mlp_weights.

    Returns (..., n_embd), matching MLP.forward in PyTorch (up to bf16 compute).
    """
    *lead, D = x.shape
    Dp, Hp = w1p.shape
    assert w2p.shape == (Hp, Dp) and Dp >= D
    compute_dtype = w1p.dtype
    out_dtype = x.dtype if out_dtype is None else out_dtype

    M = 1
    for s in lead:
        M *= int(s)

    cbytes = jnp.dtype(compute_dtype).itemsize
    obytes = jnp.dtype(out_dtype).itemsize

    # Per-generation VMEM budget: leave headroom below physical capacity so the
    # same tile choice is safe on v7x (64 MiB) and v5e/v6e (128 MiB).
    cap = _vmem_capacity_bytes()
    budget = int(max(min(cap - (16 << 20), int(cap * 0.80)), 32 << 20))

    # ---- row tile (multiple of 16 for bf16 sublane packing) -----------------
    if tm is None:
        tm = min(512, _round_up(M, 16))
    tm = max(16, _round_up(int(tm), 16))
    Mp = _round_up(M, tm)

    # ---- weight-resident vs hidden-strip scheme -----------------------------
    resident_need = (4 * Dp * Hp * cbytes                # W1 + W2, 2x buffered
                     + 2 * tm * Dp * (cbytes + obytes)   # x / out tiles, 2x
                     + tm * Hp * (4 + cbytes)            # f32 hidden + bf16 cast
                     + (2 << 20))                        # slack
    resident = (th is None or th >= Hp) and (resident_need <= budget)

    if not resident:
        if th is None:
            th = 128
            for cand in range(2048, 127, -128):
                if Hp % cand:
                    continue
                need = (4 * Dp * cand * cbytes            # W1/W2 strips, 2x buffered
                        + 2 * tm * Dp * (cbytes + obytes)  # x / out tiles, 2x
                        + tm * Dp * 4                      # f32 accumulator
                        + tm * cand * (4 + cbytes)         # f32 hidden + bf16 cast
                        + (2 << 20))
                if need <= budget:
                    th = cand
                    break
        th = int(th)
        assert Hp % th == 0, "hidden strip size must divide the padded hidden dim"

    # ---- pad activations -----------------------------------------------------
    x2d = x.reshape(M, D).astype(compute_dtype)
    if (Mp, Dp) != (M, D):
        x2d = jnp.pad(x2d, ((0, Mp - M), (0, Dp - D)))

    flops = 4 * Mp * Dp * Hp  # two matmuls, 2*M*N*K each

    if resident:
        grid = (Mp // tm,)
        in_specs = [
            pl.BlockSpec((tm, Dp), lambda i: (i, 0)),   # x row tile
            pl.BlockSpec((Dp, Hp), lambda i: (0, 0)),   # W1, VMEM-resident
            pl.BlockSpec((Hp, Dp), lambda i: (0, 0)),   # W2, VMEM-resident
        ]
        out_specs = pl.BlockSpec((tm, Dp), lambda i: (i, 0))
        scratch = []
        kernel = functools.partial(_mlp_kernel_resident,
                                   approximate_gelu=approximate_gelu)
        dims = ("parallel",)
        bytes_accessed = cbytes * (Mp * Dp + 2 * Dp * Hp) + obytes * Mp * Dp
    else:
        grid = (Mp // tm, Hp // th)
        in_specs = [
            pl.BlockSpec((tm, Dp), lambda i, k: (i, 0)),   # x row tile
            pl.BlockSpec((Dp, th), lambda i, k: (0, k)),   # W1 column strip
            pl.BlockSpec((th, Dp), lambda i, k: (k, 0)),   # W2 row strip
        ]
        out_specs = pl.BlockSpec((tm, Dp), lambda i, k: (i, 0))
        scratch = [pltpu.VMEM((tm, Dp), jnp.float32)]
        kernel = functools.partial(_mlp_kernel_strips,
                                   approximate_gelu=approximate_gelu)
        dims = ("parallel", "arbitrary")
        # Weights are re-streamed once per M tile in strip mode: account for it.
        bytes_accessed = (cbytes * (Mp * Dp + (Mp // tm) * 2 * Dp * Hp)
                          + obytes * Mp * Dp)

    cost = pl.CostEstimate(flops=flops, transcendentals=Mp * Hp,
                           bytes_accessed=bytes_accessed)

    out = pl.pallas_call(
        kernel,
        out_shape=jax.ShapeDtypeStruct((Mp, Dp), out_dtype),
        grid_spec=pltpu.PrefetchScalarGridSpec(
            num_scalar_prefetch=0,
            grid=grid,
            in_specs=in_specs,
            out_specs=out_specs,
            scratch_shapes=scratch,
        ),
        compiler_params=pltpu.CompilerParams(
            dimension_semantics=dims,
            vmem_limit_bytes=budget,
        ),
        cost_estimate=cost,
    )(x2d, w1p, w2p)

    return out[:M, :D].reshape(*lead, D)


def _reference(x, w_fc, w_proj, compute_dtype=jnp.bfloat16):
    # Mirrors the kernel's numerics: bf16 inputs, f32 matmul accumulate,
    # f32 exact-erf GELU, bf16 re-cast before the second matmul.
    *lead, D = x.shape
    M = 1
    for s in lead:
        M *= int(s)
    xc = x.reshape(M, D).astype(compute_dtype)
    w1 = w_fc.T.astype(compute_dtype)
    w2 = w_proj.T.astype(compute_dtype)
    h = jnp.dot(xc, w1, preferred_element_type=jnp.float32)
    h = 0.5 * h * (1.0 + lax.erf(h * _SQRT1_2))
    y = jnp.dot(h.astype(compute_dtype), w2, preferred_element_type=jnp.float32)
    return y.reshape(*lead, D).astype(x.dtype)


if __name__ == "__main__":
    # Small config: batch=2, seq=8, n_embd=32 -> hidden=128.
    B, T, D = 2, 8, 32
    H = 4 * D

    key = jax.random.PRNGKey(0)
    kx, kw1, kw2 = jax.random.split(key, 3)

    x = jax.random.normal(kx, (B, T, D), dtype=jnp.float32)
    # Deterministic init mimicking nn.Linear default (uniform in +-1/sqrt(fan_in)).
    w_fc = jax.random.uniform(kw1, (H, D), dtype=jnp.float32,
                              minval=-1.0 / math.sqrt(D), maxval=1.0 / math.sqrt(D))
    w_proj = jax.random.uniform(kw2, (D, H), dtype=jnp.float32,
                                minval=-1.0 / math.sqrt(H), maxval=1.0 / math.sqrt(H))

    # Weight transpose/cast/pad hoisted out of the forward path (done once).
    w1p, w2p = prepare_mlp_weights(w_fc, w_proj)

    fwd = jax.jit(mlp_forward)
    y = jax.block_until_ready(fwd(x, w1p, w2p))

    y_ref = _reference(x, w_fc, w_proj)
    assert y.shape == (B, T, D)
    assert jnp.allclose(y, y_ref, atol=2e-3, rtol=2e-3), "mismatch vs reference"

    print("KERNEL_OK")
</pallas_src>

<mosaic_0001>
module attributes {stable_mosaic.version = 11 : i64} {
  func.func @_mlp_kernel_resident(%arg0: i32, %arg1: memref<16x128xbf16, #tpu.memory_space<vmem>>, %arg2: memref<128x128xbf16, #tpu.memory_space<vmem>>, %arg3: memref<128x128xbf16, #tpu.memory_space<vmem>>, %arg4: memref<16x128xf32, #tpu.memory_space<vmem>>) attributes {dimension_semantics = [#tpu.dimension_semantics<parallel>], iteration_bounds = array<i64: 1>, scalar_prefetch = 0 : i64, scratch_operands = 0 : i64, tpu.core_type = #tpu.core_type<tc>, window_params = [{transform_indices = @transform_0, window_bounds = array<i64: 16, 128>}, {pipeline_mode = #tpu.pipeline_mode<synchronous>, transform_indices = @transform_1, window_bounds = array<i64: 128, 128>}, {pipeline_mode = #tpu.pipeline_mode<synchronous>, transform_indices = @transform_2, window_bounds = array<i64: 128, 128>}, {transform_indices = @transform_3, window_bounds = array<i64: 16, 128>}]} {
    %c0 = arith.constant 0 : index
    %c0_0 = arith.constant 0 : index
    %0 = vector.load %arg1[%c0, %c0_0] : memref<16x128xbf16, #tpu.memory_space<vmem>>, vector<16x128xbf16>
    %c0_1 = arith.constant 0 : index
    %c0_2 = arith.constant 0 : index
    %1 = vector.load %arg2[%c0_1, %c0_2] : memref<128x128xbf16, #tpu.memory_space<vmem>>, vector<128x128xbf16>
    %cst = arith.constant dense<0.000000e+00> : vector<16x128xf32>
    %2 = tpu.matmul %0, %1, %cst {dimension_numbers = #tpu.dot_dimension_numbers<[1], [0], [0], [1], [0, 0, 1, 1], [], []>} : vector<16x128xbf16>, vector<128x128xbf16>, vector<16x128xf32> -> vector<16x128xf32>
    %cst_3 = arith.constant 5.000000e-01 : f32
    %3 = vector.broadcast %cst_3 : f32 to vector<16x128xf32>
    %4 = arith.mulf %3, %2 : vector<16x128xf32>
    %cst_4 = arith.constant 0.707106769 : f32
    %5 = vector.broadcast %cst_4 : f32 to vector<16x128xf32>
    %6 = arith.mulf %2, %5 : vector<16x128xf32>
    %7 = math.erf %6 : vector<16x128xf32>
    %cst_5 = arith.constant 1.000000e+00 : f32
    %8 = vector.broadcast %cst_5 : f32 to vector<16x128xf32>
    %9 = arith.addf %8, %7 : vector<16x128xf32>
    %10 = arith.mulf %4, %9 : vector<16x128xf32>
    %11 = arith.truncf %10 : vector<16x128xf32> to vector<16x128xbf16>
    %c0_6 = arith.constant 0 : index
    %c0_7 = arith.constant 0 : index
    %12 = vector.load %arg3[%c0_6, %c0_7] : memref<128x128xbf16, #tpu.memory_space<vmem>>, vector<128x128xbf16>
    %cst_8 = arith.constant dense<0.000000e+00> : vector<16x128xf32>
    %13 = tpu.matmul %11, %12, %cst_8 {dimension_numbers = #tpu.dot_dimension_numbers<[1], [0], [0], [1], [0, 0, 1, 1], [], []>} : vector<16x128xbf16>, vector<128x128xbf16>, vector<16x128xf32> -> vector<16x128xf32>
    %c0_9 = arith.constant 0 : index
    %c0_10 = arith.constant 0 : index
    %14 = vector.load %arg4[%c0_9, %c0_10] : memref<16x128xf32, #tpu.memory_space<vmem>>, vector<16x128xf32>
    tpu.vector_store %arg4[%c0_9, %c0_10], %13 {strides = array<i32>} : memref<16x128xf32, #tpu.memory_space<vmem>>, vector<16x128xf32>,
    return
  }
  func.func @transform_0(%arg0: i32) -> (i32, i32) {
    %c0_i32 = arith.constant 0 : i32
    %c0_i32_0 = arith.constant 0 : i32
    return %arg0, %c0_i32 : i32, i32
  }
  func.func @transform_1(%arg0: i32) -> (i32, i32) {
    %c0_i32 = arith.constant 0 : i32
    %c0_i32_0 = arith.constant 0 : i32
    %c0_i32_1 = arith.constant 0 : i32
    return %c0_i32, %c0_i32_0 : i32, i32
  }
  func.func @transform_2(%arg0: i32) -> (i32, i32) {
    %c0_i32 = arith.constant 0 : i32
    %c0_i32_0 = arith.constant 0 : i32
    %c0_i32_1 = arith.constant 0 : i32
    return %c0_i32, %c0_i32_0 : i32, i32
  }
  func.func @transform_3(%arg0: i32) -> (i32, i32) {
    %c0_i32 = arith.constant 0 : i32
    %c0_i32_0 = arith.constant 0 : i32
    return %arg0, %c0_i32 : i32, i32
  }
}

</mosaic_0001>

<llo_original>
// kernel: mlp_forward.1
$region0: #{mlp_forward.1}
  #allocation0 [shape = 'u32[]', space=smem, size = 0x4, offset = 0x4, fixed_abs, tag = 'smem constant byte address 0x4 - core index']
  #allocation1 [shape = 'u32[72,128]{1,0:T(1,128)}', space=vmem, size = 0x9000, scoped, tag = 'internal scratch']
  %s0 = inlined_call_operand.vmem [shape: bf16[16,128], index: 0, kind: input, shape index: {}]
  %s1 = inlined_call_operand.hbm [shape: bf16[128,128], index: 1, kind: input, shape index: {}]
  %s2 = inlined_call_operand.hbm [shape: bf16[128,128], index: 2, kind: input, shape index: {}]
  %s3 = inlined_call_operand.vmem [shape: f32[16,128], index: 3, kind: output, shape index: {}]
  %s4 = sld [smem:[#allocation0]]
  $region30: #{mlp_forward.1} parent=0
    _
  %s6 = ssub.s32 1, %s4
  %s7 = scalar_select 0, %s6, %s4
  $region1: #{mlp_forward.1} parent=0
    #allocation2 [shape = 'u8[32768]{0}', space=vmem, size = 0x8000, scoped, tag = 'input window, operand 1, single buffered']
    #allocation3 [shape = 's32[1]{0}', space=sflag, size = 0x4, scoped, tag = 'scoped memory for mlp_forward.1']
    #allocation4 [shape = 'u8[32768]{0}', space=vmem, size = 0x8000, scoped, tag = 'input window, operand 2, single buffered']
    #allocation5 [shape = 's32[1]{0}', space=sflag, size = 0x4, scoped, tag = 'scoped memory for mlp_forward.1']
    %8 = vsyncpa [#allocation3], 0
    %9 = vsyncpa [#allocation5], 0
    // Predicated region
    $region2: #{mlp_forward.1} parent=1 // pred_check
      _
    $region3: #{mlp_forward.1} parent=1 // pred_check_branch
      %11 = sbr.rel (0) target = $region5
    $region4: #{mlp_forward.1} parent=1 // pred_region
      _
    $region5: #{mlp_forward.1} parent=1 // pred_fallthru
      _
    // Predicated region
    $region6: #{mlp_forward.1} parent=1 // pred_check
      _
    $region7: #{mlp_forward.1} parent=1 // pred_check_branch
      %13 = sbr.rel (0) target = $region9
    $region8: #{mlp_forward.1} parent=1 // pred_region
      %15 = vsyncadd [#allocation3], 0
      %s16 = sshll.u32 %s1, 4
      %s17 = int_to_ptr.hbm [resolvable:$true] %s16
      %s18 = sshll.u32 [#allocation2], 4
      %s19 = int_to_ptr.vmem [resolvable:$true] %s18
      %24 = dma.hbm_to_vmem [thread:$0]  %s17, 1024, %s19, [#allocation3], 64, 64, 4
    $region9: #{mlp_forward.1} parent=1 // pred_fallthru
      _
    // Predicated region
    $region10: #{mlp_forward.1} parent=1 // pred_check
      _
    $region11: #{mlp_forward.1} parent=1 // pred_check_branch
      %26 = sbr.rel (0) target = $region13
    $region12: #{mlp_forward.1} parent=1 // pred_region
      %28 = vsyncadd [#allocation5], 0
      %s29 = sshll.u32 %s2, 4
      %s30 = int_to_ptr.hbm [resolvable:$true] %s29
      %s31 = sshll.u32 [#allocation4], 4
      %s32 = int_to_ptr.vmem [resolvable:$true] %s31
      %37 = dma.hbm_to_vmem [thread:$0]  %s30, 1024, %s32, [#allocation5], 64, 64, 4
    $region13: #{mlp_forward.1} parent=1 // pred_fallthru
      _
    // Predicated region
    $region14: #{mlp_forward.1} parent=1 // pred_check
      _
    $region15: #{mlp_forward.1} parent=1 // pred_check_branch
      %39 = sbr.rel (0) target = $region17
    $region16: #{mlp_forward.1} parent=1 // pred_region
      %41 = dma.done [#allocation3], 1024
    $region17: #{mlp_forward.1} parent=1 // pred_fallthru
      _
    // Predicated region
    $region18: #{mlp_forward.1} parent=1 // pred_check
      _
    $region19: #{mlp_forward.1} parent=1 // pred_check_branch
      %43 = sbr.rel (0) target = $region21
    $region20: #{mlp_forward.1} parent=1 // pred_region
      %45 = dma.done [#allocation5], 1024
    $region21: #{mlp_forward.1} parent=1 // pred_fallthru
      _
    %v46 = vld [vmem:[%s0] sm:$0xf]
    %v47 = vld [vmem:[%s0 + $0x4] sm:$0xf]
    %v48 = vld [vmem:[#allocation2] sm:$0xf]
    %v49 = vld [vmem:[#allocation2 + $0x4] sm:$0xf]
    %v50 = vld [vmem:[#allocation2 + $0x8] sm:$0xf]
    %v51 = vld [vmem:[#allocation2 + $0xc] sm:$0xf]
    %v52 = vld [vmem:[#allocation2 + $0x10] sm:$0xf]
    %v53 = vld [vmem:[#allocation2 + $0x14] sm:$0xf]
    %v54 = vld [vmem:[#allocation2 + $0x18] sm:$0xf]
    %v55 = vld [vmem:[#allocation2 + $0x1c] sm:$0xf]
    %v56 = vld [vmem:[#allocation2 + $0x20] sm:$0xf]
    %v57 = vld [vmem:[#allocation2 + $0x24] sm:$0xf]
    %v58 = vld [vmem:[#allocation2 + $0x28] sm:$0xf]
    %v59 = vld [vmem:[#allocation2 + $0x2c] sm:$0xf]
    %v60 = vld [vmem:[#allocation2 + $0x30] sm:$0xf]
    %v61 = vld [vmem:[#allocation2 + $0x34] sm:$0xf]
    %v62 = vld [vmem:[#allocation2 + $0x38] sm:$0xf]
    %v63 = vld [vmem:[#allocation2 + $0x3c] sm:$0xf]
    %v66 = vunpack.c.l.b16 %v46
    %v67 = vunpack.c.l.b16 %v47
    %v68 = vpack.c.b16 %v67, %v66
    %v86 = vunpack.c.l.b16 %v48
    %v87 = vunpack.c.l.b16 %v49
    %v88 = vunpack.c.l.b16 %v50
    %v89 = vunpack.c.l.b16 %v51
    %v90 = vunpack.c.l.b16 %v52
    %v91 = vunpack.c.l.b16 %v53
    %v92 = vunpack.c.l.b16 %v54
    %v93 = vunpack.c.l.b16 %v55
    %v94 = vunpack.c.l.b16 %v56
    %v95 = vunpack.c.l.b16 %v57
    %v96 = vunpack.c.l.b16 %v58
    %v97 = vunpack.c.l.b16 %v59
    %v98 = vunpack.c.l.b16 %v60
    %v99 = vunpack.c.l.b16 %v61
    %v100 = vunpack.c.l.b16 %v62
    %v101 = vunpack.c.l.b16 %v63
    %v102 = vpack.c.b16 %v87, %v86
    %v103 = vpack.c.b16 %v89, %v88
    %v104 = vpack.c.b16 %v91, %v90
    %v105 = vpack.c.b16 %v93, %v92
    %v106 = vpack.c.b16 %v95, %v94
    %v107 = vpack.c.b16 %v97, %v96
    %v108 = vpack.c.b16 %v99, %v98
    %v109 = vpack.c.b16 %v101, %v100
    %118 = vmatpush.bf16.msra.mxu0 %v109
    %119 = vmatpush.bf16.msra.mxu0 %v108
    %120 = vmatpush.bf16.msra.mxu0 %v107
    %121 = vmatpush.bf16.msra.mxu0 %v106
    %122 = vmatpush.bf16.msra.mxu0 %v105
    %123 = vmatpush.bf16.msra.mxu0 %v104
    %124 = vmatpush.bf16.msra.mxu0 %v103
    %125 = vmatpush.bf16.msra.mxu0 %v102
    %126 = vmatmul.bf16.gmra.mxu0 %v68
    %v127 = vpop.f32.mrf.mxu0
    %v128 = vadd.f32 0.0, %v127
    %v129 = vpop.f32.mrf.mxu0
    %v130 = vadd.f32 0.0, %v129
    %131 = vdwg.mxu0
    %v132 = vmul.f32 %v128, 0.5
    %v133 = vmul.f32 %v130, 0.5
    %v134 = vmul.f32 %v128, 0.70710677
    %v135 = vmul.f32 %v130, 0.70710677
    %v136 = vmul.f32 %v134, %v134
    %v137 = vmin.f32 16.0, %v136
    %v138 = vmul.f32 %v137, 2.1237322e-06
    %v139 = vadd.f32 %v138, 0.00028619796
    %v140 = vmul.f32 %v137, %v139
    %v141 = vadd.f32 %v140, 0.0036580483
    %v142 = vmul.f32 %v137, %v141
    %v143 = vadd.f32 %v142, 0.05243302
    %v144 = vmul.f32 %v137, %v143
    %v145 = vadd.f32 %v144, 0.18741608
    %v146 = vmul.f32 %v137, %v145
    %v147 = vadd.f32 %v146, 1.1283791
    %v148 = vmul.f32 %v134, %v147
    %v149 = vmul.f32 %v137, 3.8918573e-05
    %v150 = vadd.f32 %v149, 0.001143296
    %v151 = vmul.f32 %v137, %v150
    %v152 = vadd.f32 %v151, 0.014752088
    %v153 = vmul.f32 %v137, %v152
    %v154 = vadd.f32 %v153, 0.112945676
    %v155 = vmul.f32 %v137, %v154
    %v156 = vadd.f32 %v155, 0.4994258
    %v157 = vmul.f32 %v137, %v156
    %v158 = vadd.f32 %v157, 1.0
    %v159 = vrcp.pop %v158
    %v160 = vmul.f32 %v158, %v159
    %v161 = vsub.f32 1.0, %v160
    %v162 = vmul.f32 %v159, %v161
    %v163 = vadd.f32 %v159, %v162
    %vm164 = vweird.f32 %v158
    %vm165 = vweird.f32 %v159
    %vm166 = vmor %vm164, %vm165
    %v167 = vsel %vm166, %v159, %v163
    %v168 = vand.u32 2147483647, %v158
    %vm169 = vcmp.eq.f32.partialorder %v168, 8.507059e+37
    %v170 = vand.u32 %v158, 2147483648
    %v171 = vor.u32 1.1754944e-38, %v170
    %v172 = vsel %vm169, %v171, %v167
    %v173 = vmul.f32 %v148, %v172
    %v174 = vmin.f32 %v173, 1.0
    %v175 = vmax.f32 %v174, -1.0
    %v176 = vmul.f32 %v135, %v135
    %v177 = vmin.f32 16.0, %v176
    %v178 = vmul.f32 %v177, 2.1237322e-06
    %v179 = vadd.f32 %v178, 0.00028619796
    %v180 = vmul.f32 %v177, %v179
    %v181 = vadd.f32 %v180, 0.0036580483
    %v182 = vmul.f32 %v177, %v181
    %v183 = vadd.f32 %v182, 0.05243302
    %v184 = vmul.f32 %v177, %v183
    %v185 = vadd.f32 %v184, 0.18741608
    %v186 = vmul.f32 %v177, %v185
    %v187 = vadd.f32 %v186, 1.1283791
    %v188 = vmul.f32 %v135, %v187
    %v189 = vmul.f32 %v177, 3.8918573e-05
    %v190 = vadd.f32 %v189, 0.001143296
    %v191 = vmul.f32 %v177, %v190
    %v192 = vadd.f32 %v191, 0.014752088
    %v193 = vmul.f32 %v177, %v192
    %v194 = vadd.f32 %v193, 0.112945676
    %v195 = vmul.f32 %v177, %v194
    %v196 = vadd.f32 %v195, 0.4994258
    %v197 = vmul.f32 %v177, %v196
    %v198 = vadd.f32 %v197, 1.0
    %v199 = vrcp.pop %v198
    %v200 = vmul.f32 %v198, %v199
    %v201 = vsub.f32 1.0, %v200
    %v202 = vmul.f32 %v199, %v201
    %v203 = vadd.f32 %v199, %v202
    %vm204 = vweird.f32 %v198
    %vm205 = vweird.f32 %v199
    %vm206 = vmor %vm204, %vm205
    %v207 = vsel %vm206, %v199, %v203
    %v208 = vand.u32 2147483647, %v198
    %vm209 = vcmp.eq.f32.partialorder %v208, 8.507059e+37
    %v210 = vand.u32 %v198, 2147483648
    %v211 = vor.u32 1.1754944e-38, %v210
    %v212 = vsel %vm209, %v211, %v207
    %v213 = vmul.f32 %v188, %v212
    %v214 = vmin.f32 %v213, 1.0
    %v215 = vmax.f32 %v214, -1.0
    %v216 = vadd.f32 %v175, 1.0
    %v217 = vadd.f32 %v215, 1.0
    %v218 = vmul.f32 %v132, %v216
    %v219 = vmul.f32 %v133, %v217
    %v220 = vpack.c.bf16 %v219, %v218
    %v221 = vld [vmem:[#allocation4] sm:$0xf]
    %v222 = vld [vmem:[#allocation4 + $0x4] sm:$0xf]
    %v223 = vld [vmem:[#allocation4 + $0x8] sm:$0xf]
    %v224 = vld [vmem:[#allocation4 + $0xc] sm:$0xf]
    %v225 = vld [vmem:[#allocation4 + $0x10] sm:$0xf]
    %v226 = vld [vmem:[#allocation4 + $0x14] sm:$0xf]
    %v227 = vld [vmem:[#allocation4 + $0x18] sm:$0xf]
    %v228 = vld [vmem:[#allocation4 + $0x1c] sm:$0xf]
    %v229 = vld [vmem:[#allocation4 + $0x20] sm:$0xf]
    %v230 = vld [vmem:[#allocation4 + $0x24] sm:$0xf]
    %v231 = vld [vmem:[#allocation4 + $0x28] sm:$0xf]
    %v232 = vld [vmem:[#allocation4 + $0x2c] sm:$0xf]
    %v233 = vld [vmem:[#allocation4 + $0x30] sm:$0xf]
    %v234 = vld [vmem:[#allocation4 + $0x34] sm:$0xf]
    %v235 = vld [vmem:[#allocation4 + $0x38] sm:$0xf]
    %v236 = vld [vmem:[#allocation4 + $0x3c] sm:$0xf]
    %v253 = vunpack.c.l.b16 %v221
    %v254 = vunpack.c.l.b16 %v222
    %v255 = vunpack.c.l.b16 %v223
    %v256 = vunpack.c.l.b16 %v224
    %v257 = vunpack.c.l.b16 %v225
    %v258 = vunpack.c.l.b16 %v226
    %v259 = vunpack.c.l.b16 %v227
    %v260 = vunpack.c.l.b16 %v228
    %v261 = vunpack.c.l.b16 %v229
    %v262 = vunpack.c.l.b16 %v230
    %v263 = vunpack.c.l.b16 %v231
    %v264 = vunpack.c.l.b16 %v232
    %v265 = vunpack.c.l.b16 %v233
    %v266 = vunpack.c.l.b16 %v234
    %v267 = vunpack.c.l.b16 %v235
    %v268 = vunpack.c.l.b16 %v236
    %v269 = vpack.c.b16 %v254, %v253
    %v270 = vpack.c.b16 %v256, %v255
    %v271 = vpack.c.b16 %v258, %v257
    %v272 = vpack.c.b16 %v260, %v259
    %v273 = vpack.c.b16 %v262, %v261
    %v274 = vpack.c.b16 %v264, %v263
    %v275 = vpack.c.b16 %v266, %v265
    %v276 = vpack.c.b16 %v268, %v267
    %285 = vmatpush.bf16.msra.mxu0 %v276
    %286 = vmatpush.bf16.msra.mxu0 %v275
    %287 = vmatpush.bf16.msra.mxu0 %v274
    %288 = vmatpush.bf16.msra.mxu0 %v273
    %289 = vmatpush.bf16.msra.mxu0 %v272
    %290 = vmatpush.bf16.msra.mxu0 %v271
    %291 = vmatpush.bf16.msra.mxu0 %v270
    %292 = vmatpush.bf16.msra.mxu0 %v269
    %293 = vmatmul.bf16.gmra.mxu0 %v220
    %v294 = vpop.f32.mrf.mxu0
    %v295 = vadd.f32 0.0, %v294
    %v296 = vpop.f32.mrf.mxu0
    %v297 = vadd.f32 0.0, %v296
    %298 = vdwg.mxu0
    %299 = vst [vmem:[%s3] sm:$0xff] %v295
    %300 = vst [vmem:[%s3 + $0x8] sm:$0xff] %v297
    // Predicated region
    $region22: #{mlp_forward.1} parent=1 // pred_check
      _
    $region23: #{mlp_forward.1} parent=1 // pred_check_branch
      %302 = sbr.rel (0) target = $region25
    $region24: #{mlp_forward.1} parent=1 // pred_region
      _
    $region25: #{mlp_forward.1} parent=1 // pred_fallthru
      _
    // Predicated region
    $region26: #{mlp_forward.1} parent=1 // pred_check
      _
    $region27: #{mlp_forward.1} parent=1 // pred_check_branch
      %304 = sbr.rel (0) target = $region29
    $region28: #{mlp_forward.1} parent=1 // pred_region
      _
    $region29: #{mlp_forward.1} parent=1 // pred_fallthru
      _
    %305 = vsyncpa [#allocation3], 1
    %306 = vsyncpa [#allocation5], 1

</llo_original>
